<compile_context>
chip_gen: v7x
topology: tpu7x:2x2x1
jax: 0.10.0
libtpu: 0.0.40
codegen_flags: <defaults>
</compile_context>

<pallas_src>
import jax
import jax.numpy as jnp
from jax.experimental import pallas as pl
from jax.experimental.pallas import tpu as pltpu

W_DICE = 0.8
W_BCE = 0.2
SMOOTH = 1.0
LANE = 128      # TPU lane width (last dim of every block)
SUBLANE = 8     # f32 sublane tile height
TM_MAX = 1024   # max rows per grid step: (1024,128) f32 = 512 KiB per input block


def _make_combined_loss_kernel(n_valid, tm):
    """Build the kernel for a static valid-element count and tile height."""

    def _accumulate(acc_ref, x, t, mask):
        # One exp per element, reused for both the sigmoid and the stable BCE term.
        e = jnp.exp(-jnp.abs(x))                        # exp(-|x|)
        one_plus_e = 1.0 + e
        p = jnp.where(x >= 0, 1.0, e) / one_plus_e      # == sigmoid(x), exactly
        # Numerically stable BCE-with-logits: max(x,0) - x*t + log(1 + exp(-|x|))
        bce = jnp.maximum(x, 0.0) - x * t + jnp.log1p(e)
        terms = (bce, p * t, p, t)
        if mask is not None:
            # where() (not multiply) so NaN/Inf garbage in OOB tail rows is dropped.
            terms = tuple(jnp.where(mask, v, 0.0) for v in terms)
        for k, v in enumerate(terms):
            # Fold (tm,128) -> (8,128) with pure VALU adds (no per-tile XLU reduce).
            acc_ref[k] += v.reshape(-1, SUBLANE, LANE).sum(axis=0)

    def kernel(x_ref, t_ref, out_ref, acc_ref):
        # acc_ref: VMEM f32[4,8,128]: [0]=sum(bce), [1]=sum(p*t), [2]=sum(p), [3]=sum(t)
        i = pl.program_id(0)
        is_last = i == pl.num_programs(0) - 1

        @pl.when(i == 0)
        def _init():
            acc_ref[...] = jnp.zeros_like(acc_ref)

        x = x_ref[...].astype(jnp.float32)
        t = t_ref[...].astype(jnp.float32)

        @pl.when(jnp.logical_not(is_last))
        def _body():
            _accumulate(acc_ref, x, t, mask=None)

        @pl.when(is_last)
        def _tail():
            # Only the last tile can contain padding / ragged OOB rows.
            row = jax.lax.broadcasted_iota(jnp.int32, (tm, LANE), 0)
            col = jax.lax.broadcasted_iota(jnp.int32, (tm, LANE), 1)
            gidx = (i * tm + row) * LANE + col
            _accumulate(acc_ref, x, t, mask=gidx < n_valid)

            # Finalize: one cross-lane reduction per accumulator + scalar epilogue.
            s_bce = jnp.sum(acc_ref[0])
            s_pt = jnp.sum(acc_ref[1])
            s_p = jnp.sum(acc_ref[2])
            s_t = jnp.sum(acc_ref[3])
            bce_mean = s_bce / jnp.float32(n_valid)
            dice_coeff = (2.0 * s_pt + SMOOTH) / (s_p + s_t + SMOOTH)
            out_ref[0, 0] = W_DICE * (1.0 - dice_coeff) + W_BCE * bce_mean

    return kernel


def combined_loss(predicted_logits, target_mask):
    """Pallas TPU implementation of CombinedLoss.forward."""
    n = int(predicted_logits.size)
    assert int(target_mask.size) == n

    x = predicted_logits.reshape(-1)   # keep native dtype; cast happens in-kernel
    t = target_mask.reshape(-1)

    # Reshape to (rows, LANE) so the last dim maps to lanes.  Only pad when n is
    # not already a multiple of one (8,128) tile — the common segmentation case
    # (B*C*H*W with power-of-two spatial dims) needs no pad at all.
    chunk = SUBLANE * LANE
    n_pad = ((n + chunk - 1) // chunk) * chunk
    if n_pad != n:
        # TODO(synk): tiny fallback copy for non-tile-aligned sizes; the in-kernel
        # iota mask already ignores these zeros.
        x = jnp.pad(x, (0, n_pad - n))
        t = jnp.pad(t, (0, n_pad - n))
    rows = n_pad // LANE

    tm = min(TM_MAX, rows)             # rows is a multiple of 8, so tm is too
    grid = (pl.cdiv(rows, tm),)        # ragged last block handled by in-kernel mask

    x = x.reshape(rows, LANE)
    t = t.reshape(rows, LANE)

    tile_spec = pl.BlockSpec((tm, LANE), lambda i: (i, 0))

    # TODO(synk): on v7x, split the grid across the 2 TensorCores (leading parallel
    # axis + per-core partial outputs) to reach full-chip HBM bandwidth.
    out = pl.pallas_call(
        _make_combined_loss_kernel(n, tm),
        out_shape=jax.ShapeDtypeStruct((1, 1), jnp.float32),
        grid_spec=pltpu.PrefetchScalarGridSpec(
            num_scalar_prefetch=0,
            grid=grid,
            in_specs=[tile_spec, tile_spec],
            out_specs=pl.BlockSpec(memory_space=pltpu.MemorySpace.SMEM),
            scratch_shapes=[pltpu.VMEM((4, SUBLANE, LANE), jnp.float32)],
        ),
        compiler_params=pltpu.CompilerParams(
            dimension_semantics=("arbitrary",)),
    )(x, t)
    return out[0, 0]


def _reference_loss(predicted_logits, target_mask):
    """Pure-JAX reference reproducing the PyTorch semantics."""
    x = predicted_logits.reshape(-1).astype(jnp.float32)
    t = target_mask.reshape(-1).astype(jnp.float32)
    p = jax.nn.sigmoid(x)
    bce = jnp.mean(jnp.maximum(x, 0.0) - x * t + jnp.log1p(jnp.exp(-jnp.abs(x))))
    inter = jnp.sum(p * t)
    dice = (2.0 * inter + SMOOTH) / (jnp.sum(p) + jnp.sum(t) + SMOOTH)
    return W_DICE * (1.0 - dice) + W_BCE * bce


if __name__ == "__main__":
    key = jax.random.PRNGKey(0)
    k1, k2 = jax.random.split(key)

    # NCHW logits and a binary target mask (segmentation head output).
    logits = jax.random.normal(k1, (2, 4, 16, 16), dtype=jnp.float32) * 2.0
    target = (jax.random.uniform(k2, (2, 4, 16, 16)) > 0.5).astype(jnp.float32)

    loss = jax.block_until_ready(combined_loss(logits, target))
    ref = jax.block_until_ready(_reference_loss(logits, target))
    assert jnp.allclose(loss, ref, rtol=1e-4, atol=1e-5), (loss, ref)

    print("KERNEL_OK")
</pallas_src>

<mosaic_0001>
module attributes {stable_mosaic.version = 11 : i64} {
  func.func @kernel(%arg0: i32, %arg1: memref<16x128xf32, #tpu.memory_space<vmem>>, %arg2: memref<16x128xf32, #tpu.memory_space<vmem>>, %arg3: memref<1x1xf32, #tpu.memory_space<smem>>, %arg4: memref<4x8x128xf32, #tpu.memory_space<vmem>>) attributes {dimension_semantics = [#tpu.dimension_semantics<arbitrary>], iteration_bounds = array<i64: 1>, scalar_prefetch = 0 : i64, scratch_operands = 1 : i64, tpu.core_type = #tpu.core_type<tc>, window_params = [{transform_indices = @transform_0, window_bounds = array<i64: 16, 128>}, {transform_indices = @transform_1, window_bounds = array<i64: 16, 128>}, {transform_indices = @transform_2, window_bounds = array<i64: 1, 1>}]} {
    %c0_i32 = arith.constant 0 : i32
    %0 = arith.cmpi eq, %arg0, %c0_i32 : i32
    %c0_i32_0 = arith.constant 0 : i32
    %1 = arith.cmpi eq, %arg0, %c0_i32_0 : i32
    %2 = arith.extui %1 : i1 to i32
    %c0_i32_1 = arith.constant 0 : i32
    %3 = arith.cmpi ne, %2, %c0_i32_1 : i32
    scf.if %3 {
      %cst = arith.constant 0.000000e+00 : f32
      %11 = vector.broadcast %cst : f32 to vector<4x8x128xf32>
      %c0_7 = arith.constant 0 : index
      %c0_8 = arith.constant 0 : index
      %c0_9 = arith.constant 0 : index
      %12 = vector.load %arg4[%c0_7, %c0_8, %c0_9] : memref<4x8x128xf32, #tpu.memory_space<vmem>>, vector<4x8x128xf32>
      tpu.vector_store %arg4[%c0_7, %c0_8, %c0_9], %11 {strides = array<i32>} : memref<4x8x128xf32, #tpu.memory_space<vmem>>, vector<4x8x128xf32>,
    } else {
    }
    %c0 = arith.constant 0 : index
    %c0_2 = arith.constant 0 : index
    %4 = vector.load %arg1[%c0, %c0_2] : memref<16x128xf32, #tpu.memory_space<vmem>>, vector<16x128xf32>
    %c0_3 = arith.constant 0 : index
    %c0_4 = arith.constant 0 : index
    %5 = vector.load %arg2[%c0_3, %c0_4] : memref<16x128xf32, #tpu.memory_space<vmem>>, vector<16x128xf32>
    %true = arith.constant true
    %6 = arith.xori %0, %true : i1
    %7 = arith.extui %6 : i1 to i32
    %c0_i32_5 = arith.constant 0 : i32
    %8 = arith.cmpi ne, %7, %c0_i32_5 : i32
    scf.if %8 {
      %11 = math.absf %4 : vector<16x128xf32>
      %cst = arith.constant 0.000000e+00 : f32
      %12 = vector.broadcast %cst : f32 to vector<16x128xf32>
      %13 = arith.subf %12, %11 : vector<16x128xf32>
      %14 = math.exp %13 : vector<16x128xf32>
      %cst_7 = arith.constant 1.000000e+00 : f32
      %15 = vector.broadcast %cst_7 : f32 to vector<16x128xf32>
      %16 = arith.addf %15, %14 : vector<16x128xf32>
      %cst_8 = arith.constant 0.000000e+00 : f32
      %17 = vector.broadcast %cst_8 : f32 to vector<16x128xf32>
      %18 = arith.cmpf oge, %4, %17 : vector<16x128xf32>
      %cst_9 = arith.constant 1.000000e+00 : f32
      %19 = vector.broadcast %cst_9 : f32 to vector<16x128xf32>
      %20 = arith.select %18, %19, %14 : vector<16x128xi1>, vector<16x128xf32>
      %21 = arith.divf %20, %16 : vector<16x128xf32>
      %cst_10 = arith.constant 0.000000e+00 : f32
      %22 = vector.broadcast %cst_10 : f32 to vector<16x128xf32>
      %23 = arith.maximumf %4, %22 : vector<16x128xf32>
      %24 = arith.mulf %4, %5 : vector<16x128xf32>
      %25 = arith.subf %23, %24 : vector<16x128xf32>
      %26 = math.log1p %14 : vector<16x128xf32>
      %27 = arith.addf %25, %26 : vector<16x128xf32>
      %28 = arith.mulf %21, %5 : vector<16x128xf32>
      %c0_11 = arith.constant 0 : index
      %c0_12 = arith.constant 0 : index
      %c0_13 = arith.constant 0 : index
      %29 = vector.load %arg4[%c0_11, %c0_12, %c0_13] : memref<4x8x128xf32, #tpu.memory_space<vmem>>, vector<1x8x128xf32>
      %30 = vector.shape_cast %29 : vector<1x8x128xf32> to vector<8x128xf32>
      %31 = vector.shape_cast %27 : vector<16x128xf32> to vector<2x8x128xf32>
      %cst_14 = arith.constant dense<0.000000e+00> : vector<8x128xf32>
      %32 = vector.multi_reduction <add>, %31, %cst_14 [0] : vector<2x8x128xf32> to vector<8x128xf32>
      %33 = arith.addf %30, %32 : vector<8x128xf32>
      %c0_15 = arith.constant 0 : index
      %c0_16 = arith.constant 0 : index
      %c0_17 = arith.constant 0 : index
      %34 = vector.load %arg4[%c0_15, %c0_16, %c0_17] : memref<4x8x128xf32, #tpu.memory_space<vmem>>, vector<1x8x128xf32>
      %35 = vector.shape_cast %34 : vector<1x8x128xf32> to vector<8x128xf32>
      %36 = vector.shape_cast %33 : vector<8x128xf32> to vector<1x8x128xf32>
      tpu.vector_store %arg4[%c0_15, %c0_16, %c0_17], %36 {strides = array<i32>} : memref<4x8x128xf32, #tpu.memory_space<vmem>>, vector<1x8x128xf32>,
      %c1 = arith.constant 1 : index
      %c0_18 = arith.constant 0 : index
      %c0_19 = arith.constant 0 : index
      %37 = vector.load %arg4[%c1, %c0_18, %c0_19] : memref<4x8x128xf32, #tpu.memory_space<vmem>>, vector<1x8x128xf32>
      %38 = vector.shape_cast %37 : vector<1x8x128xf32> to vector<8x128xf32>
      %39 = vector.shape_cast %28 : vector<16x128xf32> to vector<2x8x128xf32>
      %cst_20 = arith.constant dense<0.000000e+00> : vector<8x128xf32>
      %40 = vector.multi_reduction <add>, %39, %cst_20 [0] : vector<2x8x128xf32> to vector<8x128xf32>
      %41 = arith.addf %38, %40 : vector<8x128xf32>
      %c1_21 = arith.constant 1 : index
      %c0_22 = arith.constant 0 : index
      %c0_23 = arith.constant 0 : index
      %42 = vector.load %arg4[%c1_21, %c0_22, %c0_23] : memref<4x8x128xf32, #tpu.memory_space<vmem>>, vector<1x8x128xf32>
      %43 = vector.shape_cast %42 : vector<1x8x128xf32> to vector<8x128xf32>
      %44 = vector.shape_cast %41 : vector<8x128xf32> to vector<1x8x128xf32>
      tpu.vector_store %arg4[%c1_21, %c0_22, %c0_23], %44 {strides = array<i32>} : memref<4x8x128xf32, #tpu.memory_space<vmem>>, vector<1x8x128xf32>,
      %c2 = arith.constant 2 : index
      %c0_24 = arith.constant 0 : index
      %c0_25 = arith.constant 0 : index
      %45 = vector.load %arg4[%c2, %c0_24, %c0_25] : memref<4x8x128xf32, #tpu.memory_space<vmem>>, vector<1x8x128xf32>
      %46 = vector.shape_cast %45 : vector<1x8x128xf32> to vector<8x128xf32>
      %47 = vector.shape_cast %21 : vector<16x128xf32> to vector<2x8x128xf32>
      %cst_26 = arith.constant dense<0.000000e+00> : vector<8x128xf32>
      %48 = vector.multi_reduction <add>, %47, %cst_26 [0] : vector<2x8x128xf32> to vector<8x128xf32>
      %49 = arith.addf %46, %48 : vector<8x128xf32>
      %c2_27 = arith.constant 2 : index
      %c0_28 = arith.constant 0 : index
      %c0_29 = arith.constant 0 : index
      %50 = vector.load %arg4[%c2_27, %c0_28, %c0_29] : memref<4x8x128xf32, #tpu.memory_space<vmem>>, vector<1x8x128xf32>
      %51 = vector.shape_cast %50 : vector<1x8x128xf32> to vector<8x128xf32>
      %52 = vector.shape_cast %49 : vector<8x128xf32> to vector<1x8x128xf32>
      tpu.vector_store %arg4[%c2_27, %c0_28, %c0_29], %52 {strides = array<i32>} : memref<4x8x128xf32, #tpu.memory_space<vmem>>, vector<1x8x128xf32>,
      %c3 = arith.constant 3 : index
      %c0_30 = arith.constant 0 : index
      %c0_31 = arith.constant 0 : index
      %53 = vector.load %arg4[%c3, %c0_30, %c0_31] : memref<4x8x128xf32, #tpu.memory_space<vmem>>, vector<1x8x128xf32>
      %54 = vector.shape_cast %53 : vector<1x8x128xf32> to vector<8x128xf32>
      %55 = vector.shape_cast %5 : vector<16x128xf32> to vector<2x8x128xf32>
      %cst_32 = arith.constant dense<0.000000e+00> : vector<8x128xf32>
      %56 = vector.multi_reduction <add>, %55, %cst_32 [0] : vector<2x8x128xf32> to vector<8x128xf32>
      %57 = arith.addf %54, %56 : vector<8x128xf32>
      %c3_33 = arith.constant 3 : index
      %c0_34 = arith.constant 0 : index
      %c0_35 = arith.constant 0 : index
      %58 = vector.load %arg4[%c3_33, %c0_34, %c0_35] : memref<4x8x128xf32, #tpu.memory_space<vmem>>, vector<1x8x128xf32>
      %59 = vector.shape_cast %58 : vector<1x8x128xf32> to vector<8x128xf32>
      %60 = vector.shape_cast %57 : vector<8x128xf32> to vector<1x8x128xf32>
      tpu.vector_store %arg4[%c3_33, %c0_34, %c0_35], %60 {strides = array<i32>} : memref<4x8x128xf32, #tpu.memory_space<vmem>>, vector<1x8x128xf32>,
    } else {
    }
    %9 = arith.extui %0 : i1 to i32
    %c0_i32_6 = arith.constant 0 : i32
    %10 = arith.cmpi ne, %9, %c0_i32_6 : i32
    scf.if %10 {
      %11 = tpu.iota {dimensions = array<i32: 0>} : vector<16x128xi32>
      %12 = tpu.iota {dimensions = array<i32: 1>} : vector<16x128xi32>
      %c16_i32 = arith.constant 16 : i32
      %13 = arith.muli %arg0, %c16_i32 : i32
      %14 = vector.broadcast %13 : i32 to vector<16x128xi32>
      %15 = arith.addi %14, %11 : vector<16x128xi32>
      %c128_i32 = arith.constant 128 : i32
      %16 = vector.broadcast %c128_i32 : i32 to vector<16x128xi32>
      %17 = arith.muli %15, %16 : vector<16x128xi32>
      %18 = arith.addi %17, %12 : vector<16x128xi32>
      %c2048_i32 = arith.constant 2048 : i32
      %19 = vector.broadcast %c2048_i32 : i32 to vector<16x128xi32>
      %20 = arith.cmpi slt, %18, %19 : vector<16x128xi32>
      %21 = math.absf %4 : vector<16x128xf32>
      %cst = arith.constant 0.000000e+00 : f32
      %22 = vector.broadcast %cst : f32 to vector<16x128xf32>
      %23 = arith.subf %22, %21 : vector<16x128xf32>
      %24 = math.exp %23 : vector<16x128xf32>
      %cst_7 = arith.constant 1.000000e+00 : f32
      %25 = vector.broadcast %cst_7 : f32 to vector<16x128xf32>
      %26 = arith.addf %25, %24 : vector<16x128xf32>
      %cst_8 = arith.constant 0.000000e+00 : f32
      %27 = vector.broadcast %cst_8 : f32 to vector<16x128xf32>
      %28 = arith.cmpf oge, %4, %27 : vector<16x128xf32>
      %cst_9 = arith.constant 1.000000e+00 : f32
      %29 = vector.broadcast %cst_9 : f32 to vector<16x128xf32>
      %30 = arith.select %28, %29, %24 : vector<16x128xi1>, vector<16x128xf32>
      %31 = arith.divf %30, %26 : vector<16x128xf32>
      %cst_10 = arith.constant 0.000000e+00 : f32
      %32 = vector.broadcast %cst_10 : f32 to vector<16x128xf32>
      %33 = arith.maximumf %4, %32 : vector<16x128xf32>
      %34 = arith.mulf %4, %5 : vector<16x128xf32>
      %35 = arith.subf %33, %34 : vector<16x128xf32>
      %36 = math.log1p %24 : vector<16x128xf32>
      %37 = arith.addf %35, %36 : vector<16x128xf32>
      %38 = arith.mulf %31, %5 : vector<16x128xf32>
      %cst_11 = arith.constant 0.000000e+00 : f32
      %39 = vector.broadcast %cst_11 : f32 to vector<16x128xf32>
      %40 = arith.select %20, %37, %39 : vector<16x128xi1>, vector<16x128xf32>
      %cst_12 = arith.constant 0.000000e+00 : f32
      %41 = vector.broadcast %cst_12 : f32 to vector<16x128xf32>
      %42 = arith.select %20, %38, %41 : vector<16x128xi1>, vector<16x128xf32>
      %cst_13 = arith.constant 0.000000e+00 : f32
      %43 = vector.broadcast %cst_13 : f32 to vector<16x128xf32>
      %44 = arith.select %20, %31, %43 : vector<16x128xi1>, vector<16x128xf32>
      %cst_14 = arith.constant 0.000000e+00 : f32
      %45 = vector.broadcast %cst_14 : f32 to vector<16x128xf32>
      %46 = arith.select %20, %5, %45 : vector<16x128xi1>, vector<16x128xf32>
      %c0_15 = arith.constant 0 : index
      %c0_16 = arith.constant 0 : index
      %c0_17 = arith.constant 0 : index
      %47 = vector.load %arg4[%c0_15, %c0_16, %c0_17] : memref<4x8x128xf32, #tpu.memory_space<vmem>>, vector<1x8x128xf32>
      %48 = vector.shape_cast %47 : vector<1x8x128xf32> to vector<8x128xf32>
      %49 = vector.shape_cast %40 : vector<16x128xf32> to vector<2x8x128xf32>
      %cst_18 = arith.constant dense<0.000000e+00> : vector<8x128xf32>
      %50 = vector.multi_reduction <add>, %49, %cst_18 [0] : vector<2x8x128xf32> to vector<8x128xf32>
      %51 = arith.addf %48, %50 : vector<8x128xf32>
      %c0_19 = arith.constant 0 : index
      %c0_20 = arith.constant 0 : index
      %c0_21 = arith.constant 0 : index
      %52 = vector.load %arg4[%c0_19, %c0_20, %c0_21] : memref<4x8x128xf32, #tpu.memory_space<vmem>>, vector<1x8x128xf32>
      %53 = vector.shape_cast %52 : vector<1x8x128xf32> to vector<8x128xf32>
      %54 = vector.shape_cast %51 : vector<8x128xf32> to vector<1x8x128xf32>
      tpu.vector_store %arg4[%c0_19, %c0_20, %c0_21], %54 {strides = array<i32>} : memref<4x8x128xf32, #tpu.memory_space<vmem>>, vector<1x8x128xf32>,
      %c1 = arith.constant 1 : index
      %c0_22 = arith.constant 0 : index
      %c0_23 = arith.constant 0 : index
      %55 = vector.load %arg4[%c1, %c0_22, %c0_23] : memref<4x8x128xf32, #tpu.memory_space<vmem>>, vector<1x8x128xf32>
      %56 = vector.shape_cast %55 : vector<1x8x128xf32> to vector<8x128xf32>
      %57 = vector.shape_cast %42 : vector<16x128xf32> to vector<2x8x128xf32>
      %cst_24 = arith.constant dense<0.000000e+00> : vector<8x128xf32>
      %58 = vector.multi_reduction <add>, %57, %cst_24 [0] : vector<2x8x128xf32> to vector<8x128xf32>
      %59 = arith.addf %56, %58 : vector<8x128xf32>
      %c1_25 = arith.constant 1 : index
      %c0_26 = arith.constant 0 : index
      %c0_27 = arith.constant 0 : index
      %60 = vector.load %arg4[%c1_25, %c0_26, %c0_27] : memref<4x8x128xf32, #tpu.memory_space<vmem>>, vector<1x8x128xf32>
      %61 = vector.shape_cast %60 : vector<1x8x128xf32> to vector<8x128xf32>
      %62 = vector.shape_cast %59 : vector<8x128xf32> to vector<1x8x128xf32>
      tpu.vector_store %arg4[%c1_25, %c0_26, %c0_27], %62 {strides = array<i32>} : memref<4x8x128xf32, #tpu.memory_space<vmem>>, vector<1x8x128xf32>,
      %c2 = arith.constant 2 : index
      %c0_28 = arith.constant 0 : index
      %c0_29 = arith.constant 0 : index
      %63 = vector.load %arg4[%c2, %c0_28, %c0_29] : memref<4x8x128xf32, #tpu.memory_space<vmem>>, vector<1x8x128xf32>
      %64 = vector.shape_cast %63 : vector<1x8x128xf32> to vector<8x128xf32>
      %65 = vector.shape_cast %44 : vector<16x128xf32> to vector<2x8x128xf32>
      %cst_30 = arith.constant dense<0.000000e+00> : vector<8x128xf32>
      %66 = vector.multi_reduction <add>, %65, %cst_30 [0] : vector<2x8x128xf32> to vector<8x128xf32>
      %67 = arith.addf %64, %66 : vector<8x128xf32>
      %c2_31 = arith.constant 2 : index
      %c0_32 = arith.constant 0 : index
      %c0_33 = arith.constant 0 : index
      %68 = vector.load %arg4[%c2_31, %c0_32, %c0_33] : memref<4x8x128xf32, #tpu.memory_space<vmem>>, vector<1x8x128xf32>
      %69 = vector.shape_cast %68 : vector<1x8x128xf32> to vector<8x128xf32>
      %70 = vector.shape_cast %67 : vector<8x128xf32> to vector<1x8x128xf32>
      tpu.vector_store %arg4[%c2_31, %c0_32, %c0_33], %70 {strides = array<i32>} : memref<4x8x128xf32, #tpu.memory_space<vmem>>, vector<1x8x128xf32>,
      %c3 = arith.constant 3 : index
      %c0_34 = arith.constant 0 : index
      %c0_35 = arith.constant 0 : index
      %71 = vector.load %arg4[%c3, %c0_34, %c0_35] : memref<4x8x128xf32, #tpu.memory_space<vmem>>, vector<1x8x128xf32>
      %72 = vector.shape_cast %71 : vector<1x8x128xf32> to vector<8x128xf32>
      %73 = vector.shape_cast %46 : vector<16x128xf32> to vector<2x8x128xf32>
      %cst_36 = arith.constant dense<0.000000e+00> : vector<8x128xf32>
      %74 = vector.multi_reduction <add>, %73, %cst_36 [0] : vector<2x8x128xf32> to vector<8x128xf32>
      %75 = arith.addf %72, %74 : vector<8x128xf32>
      %c3_37 = arith.constant 3 : index
      %c0_38 = arith.constant 0 : index
      %c0_39 = arith.constant 0 : index
      %76 = vector.load %arg4[%c3_37, %c0_38, %c0_39] : memref<4x8x128xf32, #tpu.memory_space<vmem>>, vector<1x8x128xf32>
      %77 = vector.shape_cast %76 : vector<1x8x128xf32> to vector<8x128xf32>
      %78 = vector.shape_cast %75 : vector<8x128xf32> to vector<1x8x128xf32>
      tpu.vector_store %arg4[%c3_37, %c0_38, %c0_39], %78 {strides = array<i32>} : memref<4x8x128xf32, #tpu.memory_space<vmem>>, vector<1x8x128xf32>,
      %c0_40 = arith.constant 0 : index
      %c0_41 = arith.constant 0 : index
      %c0_42 = arith.constant 0 : index
      %79 = vector.load %arg4[%c0_40, %c0_41, %c0_42] : memref<4x8x128xf32, #tpu.memory_space<vmem>>, vector<1x8x128xf32>
      %80 = vector.shape_cast %79 : vector<1x8x128xf32> to vector<8x128xf32>
      %81 = vector.shape_cast %80 : vector<8x128xf32> to vector<1x8x128xf32>
      %cst_43 = arith.constant dense<0.000000e+00> : vector<1xf32>
      %82 = vector.multi_reduction <add>, %81, %cst_43 [1, 2] : vector<1x8x128xf32> to vector<1xf32>
      %83 = vector.shape_cast %82 : vector<1xf32> to vector<1x1x1xf32>
      %84 = vector.extract %83[0, 0, 0] : f32 from vector<1x1x1xf32>
      %c1_44 = arith.constant 1 : index
      %c0_45 = arith.constant 0 : index
      %c0_46 = arith.constant 0 : index
      %85 = vector.load %arg4[%c1_44, %c0_45, %c0_46] : memref<4x8x128xf32, #tpu.memory_space<vmem>>, vector<1x8x128xf32>
      %86 = vector.shape_cast %85 : vector<1x8x128xf32> to vector<8x128xf32>
      %87 = vector.shape_cast %86 : vector<8x128xf32> to vector<1x8x128xf32>
      %cst_47 = arith.constant dense<0.000000e+00> : vector<1xf32>
      %88 = vector.multi_reduction <add>, %87, %cst_47 [1, 2] : vector<1x8x128xf32> to vector<1xf32>
      %89 = vector.shape_cast %88 : vector<1xf32> to vector<1x1x1xf32>
      %90 = vector.extract %89[0, 0, 0] : f32 from vector<1x1x1xf32>
      %c2_48 = arith.constant 2 : index
      %c0_49 = arith.constant 0 : index
      %c0_50 = arith.constant 0 : index
      %91 = vector.load %arg4[%c2_48, %c0_49, %c0_50] : memref<4x8x128xf32, #tpu.memory_space<vmem>>, vector<1x8x128xf32>
      %92 = vector.shape_cast %91 : vector<1x8x128xf32> to vector<8x128xf32>
      %93 = vector.shape_cast %92 : vector<8x128xf32> to vector<1x8x128xf32>
      %cst_51 = arith.constant dense<0.000000e+00> : vector<1xf32>
      %94 = vector.multi_reduction <add>, %93, %cst_51 [1, 2] : vector<1x8x128xf32> to vector<1xf32>
      %95 = vector.shape_cast %94 : vector<1xf32> to vector<1x1x1xf32>
      %96 = vector.extract %95[0, 0, 0] : f32 from vector<1x1x1xf32>
      %c3_52 = arith.constant 3 : index
      %c0_53 = arith.constant 0 : index
      %c0_54 = arith.constant 0 : index
      %97 = vector.load %arg4[%c3_52, %c0_53, %c0_54] : memref<4x8x128xf32, #tpu.memory_space<vmem>>, vector<1x8x128xf32>
      %98 = vector.shape_cast %97 : vector<1x8x128xf32> to vector<8x128xf32>
      %99 = vector.shape_cast %98 : vector<8x128xf32> to vector<1x8x128xf32>
      %cst_55 = arith.constant dense<0.000000e+00> : vector<1xf32>
      %100 = vector.multi_reduction <add>, %99, %cst_55 [1, 2] : vector<1x8x128xf32> to vector<1xf32>
      %101 = vector.shape_cast %100 : vector<1xf32> to vector<1x1x1xf32>
      %102 = vector.extract %101[0, 0, 0] : f32 from vector<1x1x1xf32>
      %cst_56 = arith.constant 2.048000e+03 : f32
      %103 = arith.divf %84, %cst_56 : f32
      %cst_57 = arith.constant 2.000000e+00 : f32
      %104 = arith.mulf %cst_57, %90 : f32
      %cst_58 = arith.constant 1.000000e+00 : f32
      %105 = arith.addf %104, %cst_58 : f32
      %106 = arith.addf %96, %102 : f32
      %cst_59 = arith.constant 1.000000e+00 : f32
      %107 = arith.addf %106, %cst_59 : f32
      %108 = arith.divf %105, %107 : f32
      %cst_60 = arith.constant 1.000000e+00 : f32
      %109 = arith.subf %cst_60, %108 : f32
      %cst_61 = arith.constant 8.000000e-01 : f32
      %110 = arith.mulf %cst_61, %109 : f32
      %cst_62 = arith.constant 2.000000e-01 : f32
      %111 = arith.mulf %cst_62, %103 : f32
      %112 = arith.addf %110, %111 : f32
      %c0_63 = arith.constant 0 : index
      %c0_64 = arith.constant 0 : index
      %113 = memref.load %arg3[%c0_63, %c0_64] : memref<1x1xf32, #tpu.memory_space<smem>>
      memref.store %112, %arg3[%c0_63, %c0_64] : memref<1x1xf32, #tpu.memory_space<smem>>
    } else {
    }
    return
  }
  func.func @transform_0(%arg0: i32) -> (i32, i32) {
    %c0_i32 = arith.constant 0 : i32
    %c0_i32_0 = arith.constant 0 : i32
    return %arg0, %c0_i32 : i32, i32
  }
  func.func @transform_1(%arg0: i32) -> (i32, i32) {
    %c0_i32 = arith.constant 0 : i32
    %c0_i32_0 = arith.constant 0 : i32
    return %arg0, %c0_i32 : i32, i32
  }
  func.func @transform_2(%arg0: i32) -> (i32, i32) {
    %c0_i32 = arith.constant 0 : i32
    %c0_i32_0 = arith.constant 0 : i32
    %c0_i32_1 = arith.constant 0 : i32
    return %c0_i32, %c0_i32_0 : i32, i32
  }
}

</mosaic_0001>

<llo_original>
// kernel: tpu_custom_call.1
$region0: #{tpu_custom_call.1}
  #allocation0 [shape = 'u32[]', space=smem, size = 0x4, offset = 0x4, fixed_abs, tag = 'smem constant byte address 0x4 - core index']
  #allocation1 [shape = 'u32[144,128]{1,0:T(1,128)}', space=vmem, size = 0x12000, scoped, tag = 'internal scratch']
  #allocation2 [shape = 'f32[4,8,128]{2,1,0:T(8,128)}', space=vmem, size = 0x4000, scoped, tag = 'scratch operand']
  %s0 = inlined_call_operand.hbm [shape: f32[16,128], index: 0, kind: input, shape index: {}]
  %s1 = inlined_call_operand.hbm [shape: f32[16,128], index: 1, kind: input, shape index: {}]
  %s2 = inlined_call_operand.hbm [shape: f32[1,1], index: 2, kind: output, shape index: {}]
  %s3 = sld [smem:[#allocation0]]
  $region38: #{tpu_custom_call.1} parent=0
    _
  %s5 = ssub.s32 1, %s3
  %s6 = scalar_select 0, %s5, %s3
  $region1: #{tpu_custom_call.1} parent=0
    #allocation3 [shape = 'u8[8192]{0}', space=vmem, size = 0x2000, scoped, tag = 'input window, operand 0, single buffered']
    #allocation4 [shape = 's32[1]{0}', space=sflag, size = 0x4, scoped, tag = 'scoped memory for tpu_custom_call.1']
    #allocation5 [shape = 's32[1]{0}', space=sflag, size = 0x4, scoped, tag = 'scoped memory for tpu_custom_call.1']
    #allocation6 [shape = 'u8[8192]{0}', space=vmem, size = 0x2000, scoped, tag = 'input window, operand 1, single buffered']
    #allocation7 [shape = 's32[1]{0}', space=sflag, size = 0x4, scoped, tag = 'scoped memory for tpu_custom_call.1']
    #allocation8 [shape = 'u8[512]{0}', space=smem, size = 0x200, scoped, tag = 'output window, operand 0, single buffered']
    %7 = vsyncpa [#allocation4], 0
    %8 = vsyncpa [#allocation7], 0
    %9 = vsyncpa [#allocation5], 0
    // Predicated region
    $region2: #{tpu_custom_call.1} parent=1 // pred_check
      _
    $region3: #{tpu_custom_call.1} parent=1 // pred_check_branch
      %11 = sbr.rel (0) target = $region5
    $region4: #{tpu_custom_call.1} parent=1 // pred_region
      %s13 = ssub.s32 256, 256
      %14 = vsyncadd [#allocation4], %s13
      %s15 = sshll.u32 [#allocation3], 4
      %s16 = int_to_ptr.vmem [resolvable:$true] %s15
      %21 = dma.hbm_to_vmem [thread:$0]  %s0, 256, %s16, [#allocation4], 128, 128, 8
    $region5: #{tpu_custom_call.1} parent=1 // pred_fallthru
      _
    // Predicated region
    $region6: #{tpu_custom_call.1} parent=1 // pred_check
      _
    $region7: #{tpu_custom_call.1} parent=1 // pred_check_branch
      %23 = sbr.rel (0) target = $region9
    $region8: #{tpu_custom_call.1} parent=1 // pred_region
      %s25 = ssub.s32 256, 256
      %26 = vsyncadd [#allocation7], %s25
      %s27 = sshll.u32 [#allocation6], 4
      %s28 = int_to_ptr.vmem [resolvable:$true] %s27
      %33 = dma.hbm_to_vmem [thread:$0]  %s1, 256, %s28, [#allocation7], 128, 128, 8
    $region9: #{tpu_custom_call.1} parent=1 // pred_fallthru
      _
    // Predicated region
    $region10: #{tpu_custom_call.1} parent=1 // pred_check
      _
    $region11: #{tpu_custom_call.1} parent=1 // pred_check_branch
      %35 = sbr.rel (0) target = $region13
    $region12: #{tpu_custom_call.1} parent=1 // pred_region
      %36 = dma.done [#allocation4], 256
    $region13: #{tpu_custom_call.1} parent=1 // pred_fallthru
      _
    // Predicated region
    $region14: #{tpu_custom_call.1} parent=1 // pred_check
      _
    $region15: #{tpu_custom_call.1} parent=1 // pred_check_branch
      %38 = sbr.rel (0) target = $region17
    $region16: #{tpu_custom_call.1} parent=1 // pred_region
      %39 = dma.done [#allocation7], 256
    $region17: #{tpu_custom_call.1} parent=1 // pred_fallthru
      _
    %p40 = scmp.eq.s32.totalorder 0, 0
    // Predicated region
    $region18: #{tpu_custom_call.1} parent=1 // pred_check
      %p41 = pneg %p40
    $region19: #{tpu_custom_call.1} parent=1 // pred_check_branch
      %43 = sbr.rel (%p41) target = $region21
    $region20: #{tpu_custom_call.1} parent=1 // pred_region
      %44 = vst [vmem:[#allocation2] sm:$0xff] 0.0
      %45 = vst [vmem:[#allocation2 + $0x8] sm:$0xff] 0.0
      %46 = vst [vmem:[#allocation2 + $0x10] sm:$0xff] 0.0
      %47 = vst [vmem:[#allocation2 + $0x18] sm:$0xff] 0.0
    $region21: #{tpu_custom_call.1} parent=1 // pred_fallthru
      _
    %v48 = vld [vmem:[#allocation3] sm:$0xff]
    %v49 = vld [vmem:[#allocation3 + $0x8] sm:$0xff]
    %v50 = vld [vmem:[#allocation6] sm:$0xff]
    %v51 = vld [vmem:[#allocation6 + $0x8] sm:$0xff]
    %p52 = scmp.ne.s32.totalorder 0, 0
    // Predicated region
    $region22: #{tpu_custom_call.1} parent=1 // pred_check
      %p53 = pneg %p52
    $region23: #{tpu_custom_call.1} parent=1 // pred_check_branch
      %55 = sbr.rel (%p53) target = $region25
    $region24: #{tpu_custom_call.1} parent=1 // pred_region
      %v56 = vand.u32 2147483647, %v48
      %v57 = vand.u32 2147483647, %v49
      %v58 = vsub.f32 0.0, %v56
      %v59 = vsub.f32 0.0, %v57
      %v60 = vmul.f32 %v58, 1.442695
      %v61 = vpow.pop %v60
      %v62 = vmul.f32 %v59, 1.442695
      %v63 = vpow.pop %v62
      %v64 = vadd.f32 %v61, 1.0
      %v65 = vadd.f32 %v63, 1.0
      %vm66 = vcmp.ge.f32.partialorder %v48, 0.0
      %vm67 = vcmp.ge.f32.partialorder %v49, 0.0
      %v68 = vsel %vm66, 1.0, %v61
      %v69 = vsel %vm67, 1.0, %v63
      %v70 = vrcp.pop %v64
      %v71 = vmul.f32 %v68, %v70
      %v72 = vrcp.pop %v65
      %v73 = vmul.f32 %v69, %v72
      %v74 = vmax.f32 %v48, 0.0
      %v75 = vmax.f32 %v49, 0.0
      %v76 = vmul.f32 %v48, %v50
      %v77 = vmul.f32 %v49, %v51
      %v78 = vsub.f32 %v74, %v76
      %v79 = vsub.f32 %v75, %v77
      %v80 = vadd.f32 %v61, 1.0
      %v81 = vlog2.pop %v80
      %v82 = vmul.f32 %v81, 0.6931472
      %v83 = vmul.f32 -0.5, %v61
      %v84 = vadd.f32 %v83, 1.0
      %v85 = vmul.f32 %v84, %v61
      %v86 = vand.u32 2147483647, %v61
      %vm87 = vcmp.lt.f32.partialorder %v86, 0.0004427343
      %v88 = vsel %vm87, %v85, %v82
      %v89 = vadd.f32 %v63, 1.0
      %v90 = vlog2.pop %v89
      %v91 = vmul.f32 %v90, 0.6931472
      %v92 = vmul.f32 -0.5, %v63
      %v93 = vadd.f32 %v92, 1.0
      %v94 = vmul.f32 %v93, %v63
      %v95 = vand.u32 2147483647, %v63
      %vm96 = vcmp.lt.f32.partialorder %v95, 0.0004427343
      %v97 = vsel %vm96, %v94, %v91
      %v98 = vadd.f32 %v78, %v88
      %v99 = vadd.f32 %v79, %v97
      %v100 = vmul.f32 %v71, %v50
      %v101 = vmul.f32 %v73, %v51
      %v102 = vld [vmem:[#allocation2] sm:$0xff]
      %v103 = vadd.f32 %v98, %v99
      %v104 = vadd.f32 %v102, %v103
      %105 = vst [vmem:[#allocation2] sm:$0xff] %v104
      %s106 = scalar_lea.vmem [#allocation2], 8
      %v107 = vld [vmem:[%s106] sm:$0xff]
      %v108 = vadd.f32 %v100, %v101
      %v109 = vadd.f32 %v107, %v108
      %110 = vst [vmem:[%s106] sm:$0xff] %v109
      %s111 = scalar_lea.vmem [#allocation2], 16
      %v112 = vld [vmem:[%s111] sm:$0xff]
      %v113 = vadd.f32 %v71, %v73
      %v114 = vadd.f32 %v112, %v113
      %115 = vst [vmem:[%s111] sm:$0xff] %v114
      %s116 = scalar_lea.vmem [#allocation2], 24
      %v117 = vld [vmem:[%s116] sm:$0xff]
      %v118 = vadd.f32 %v50, %v51
      %v119 = vadd.f32 %v117, %v118
      %120 = vst [vmem:[%s116] sm:$0xff] %v119
    $region25: #{tpu_custom_call.1} parent=1 // pred_fallthru
      _
    // Predicated region
    $region26: #{tpu_custom_call.1} parent=1 // pred_check
      %p121 = pneg %p40
    $region27: #{tpu_custom_call.1} parent=1 // pred_check_branch
      %123 = sbr.rel (%p121) target = $region29
    $region28: #{tpu_custom_call.1} parent=1 // pred_region
      %v124 = vlaneseq
      %v125 = vshrl.u32 %v124, 7
      %v126 = vadd.s32 %v125, 8
      %v127 = vlaneseq
      %v128 = vand.u32 %v127, 127
      %s129 = smul.u32 0, 16
      %v130 = vstv %s129
      %v131 = vadd.s32 %v130, %v125
      %v132 = vadd.s32 %v130, %v126
      %v133 = vmul.u32 %v131, 128
      %v134 = vmul.u32 %v132, 128
      %v135 = vadd.s32 %v133, %v128
      %v136 = vadd.s32 %v134, %v128
      %vm137 = vcmp.lt.s32.totalorder %v135, 2048
      %vm138 = vcmp.lt.s32.totalorder %v136, 2048
      %v139 = vand.u32 2147483647, %v48
      %v140 = vand.u32 2147483647, %v49
      %v141 = vsub.f32 0.0, %v139
      %v142 = vsub.f32 0.0, %v140
      %v143 = vmul.f32 %v141, 1.442695
      %v144 = vpow.pop %v143
      %v145 = vmul.f32 %v142, 1.442695
      %v146 = vpow.pop %v145
      %v147 = vadd.f32 %v144, 1.0
      %v148 = vadd.f32 %v146, 1.0
      %vm149 = vcmp.ge.f32.partialorder %v48, 0.0
      %vm150 = vcmp.ge.f32.partialorder %v49, 0.0
      %v151 = vsel %vm149, 1.0, %v144
      %v152 = vsel %vm150, 1.0, %v146
      %v153 = vrcp.pop %v147
      %v154 = vmul.f32 %v151, %v153
      %v155 = vrcp.pop %v148
      %v156 = vmul.f32 %v152, %v155
      %v157 = vmax.f32 %v48, 0.0
      %v158 = vmax.f32 %v49, 0.0
      %v159 = vmul.f32 %v48, %v50
      %v160 = vmul.f32 %v49, %v51
      %v161 = vsub.f32 %v157, %v159
      %v162 = vsub.f32 %v158, %v160
      %v163 = vadd.f32 %v144, 1.0
      %v164 = vlog2.pop %v163
      %v165 = vmul.f32 %v164, 0.6931472
      %v166 = vmul.f32 -0.5, %v144
      %v167 = vadd.f32 %v166, 1.0
      %v168 = vmul.f32 %v167, %v144
      %v169 = vand.u32 2147483647, %v144
      %vm170 = vcmp.lt.f32.partialorder %v169, 0.0004427343
      %v171 = vsel %vm170, %v168, %v165
      %v172 = vadd.f32 %v146, 1.0
      %v173 = vlog2.pop %v172
      %v174 = vmul.f32 %v173, 0.6931472
      %v175 = vmul.f32 -0.5, %v146
      %v176 = vadd.f32 %v175, 1.0
      %v177 = vmul.f32 %v176, %v146
      %v178 = vand.u32 2147483647, %v146
      %vm179 = vcmp.lt.f32.partialorder %v178, 0.0004427343
      %v180 = vsel %vm179, %v177, %v174
      %v181 = vadd.f32 %v161, %v171
      %v182 = vadd.f32 %v162, %v180
      %v183 = vmul.f32 %v154, %v50
      %v184 = vmul.f32 %v156, %v51
      %v185 = vsel %vm137, %v181, 0.0
      %v186 = vsel %vm138, %v182, 0.0
      %v187 = vsel %vm137, %v183, 0.0
      %v188 = vsel %vm138, %v184, 0.0
      %v189 = vsel %vm137, %v154, 0.0
      %v190 = vsel %vm138, %v156, 0.0
      %v191 = vsel %vm137, %v50, 0.0
      %v192 = vsel %vm138, %v51, 0.0
      %v193 = vld [vmem:[#allocation2] sm:$0xff]
      %v194 = vadd.f32 %v185, %v186
      %v195 = vadd.f32 %v193, %v194
      %196 = vst [vmem:[#allocation2] sm:$0xff] %v195
      %s197 = scalar_lea.vmem [#allocation2], 8
      %v198 = vld [vmem:[%s197] sm:$0xff]
      %v199 = vadd.f32 %v187, %v188
      %v200 = vadd.f32 %v198, %v199
      %201 = vst [vmem:[%s197] sm:$0xff] %v200
      %s202 = scalar_lea.vmem [#allocation2], 16
      %v203 = vld [vmem:[%s202] sm:$0xff]
      %v204 = vadd.f32 %v189, %v190
      %v205 = vadd.f32 %v203, %v204
      %206 = vst [vmem:[%s202] sm:$0xff] %v205
      %s207 = scalar_lea.vmem [#allocation2], 24
      %v208 = vld [vmem:[%s207] sm:$0xff]
      %v209 = vadd.f32 %v191, %v192
      %v210 = vadd.f32 %v208, %v209
      %211 = vst [vmem:[%s207] sm:$0xff] %v210
      %v212 = vld [vmem:[#allocation2] sm:$0xff]
      %213 = vadd.xlane.f32.xlu0 %v212
      %v214 = vpop.xlane.xlu0 %213
      %v215 = vrot.slane %v214, 4
      %v216 = vadd.f32 %v214, %v215
      %v217 = vrot.slane %v216, 2
      %v218 = vadd.f32 %v216, %v217
      %v219 = vrot.slane %v218, 1
      %v220 = vadd.f32 %v218, %v219
      %s221 = vtos %v220
      %v222 = vld [vmem:[%s197] sm:$0xff]
      %223 = vadd.xlane.f32.xlu0 %v222
      %v224 = vpop.xlane.xlu0 %223
      %v225 = vrot.slane %v224, 4
      %v226 = vadd.f32 %v224, %v225
      %v227 = vrot.slane %v226, 2
      %v228 = vadd.f32 %v226, %v227
      %v229 = vrot.slane %v228, 1
      %v230 = vadd.f32 %v228, %v229
      %s231 = vtos %v230
      %v232 = vld [vmem:[%s202] sm:$0xff]
      %233 = vadd.xlane.f32.xlu0 %v232
      %v234 = vpop.xlane.xlu0 %233
      %v235 = vrot.slane %v234, 4
      %v236 = vadd.f32 %v234, %v235
      %v237 = vrot.slane %v236, 2
      %v238 = vadd.f32 %v236, %v237
      %v239 = vrot.slane %v238, 1
      %v240 = vadd.f32 %v238, %v239
      %s241 = vtos %v240
      %v242 = vld [vmem:[%s207] sm:$0xff]
      %243 = vadd.xlane.f32.xlu0 %v242
      %v244 = vpop.xlane.xlu0 %243
      %v245 = vrot.slane %v244, 4
      %v246 = vadd.f32 %v244, %v245
      %v247 = vrot.slane %v246, 2
      %v248 = vadd.f32 %v246, %v247
      %v249 = vrot.slane %v248, 1
      %v250 = vadd.f32 %v248, %v249
      %s251 = vtos %v250
      %v252 = vrcp.pop 2048.0
      %s253 = vtos %v252
      %s254 = smul.f32 %s221, %s253
      %s255 = smul.f32 %s231, 2.0
      %s256 = sadd.f32 %s255, 1.0
      %s257 = sadd.f32 %s241, %s251
      %s258 = sadd.f32 %s257, 1.0
      %v259 = vstv %s258
      %v260 = vrcp.pop %v259
      %s261 = vtos %v260
      %s262 = smul.f32 %s256, %s261
      %s263 = ssub.f32 1.0, %s262
      %s264 = smul.f32 %s263, 0.8
      %s265 = smul.f32 %s254, 0.2
      %s266 = sadd.f32 %s264, %s265
      %s267 = scalar_lea.smem [#allocation8], 0
      %268 = sst [smem:[%s267]] %s266
    $region29: #{tpu_custom_call.1} parent=1 // pred_fallthru
      _
    // Predicated region
    $region30: #{tpu_custom_call.1} parent=1 // pred_check
      _
    $region31: #{tpu_custom_call.1} parent=1 // pred_check_branch
      %270 = sbr.rel (0) target = $region33
    $region32: #{tpu_custom_call.1} parent=1 // pred_region
      %s272 = ssub.s32 16, 16
      %273 = vsyncadd [#allocation5], %s272
      %276 = dma.smem_to_hbm [#allocation8], 16, %s2, [#allocation5]
    $region33: #{tpu_custom_call.1} parent=1 // pred_fallthru
      _
    // Predicated region
    $region34: #{tpu_custom_call.1} parent=1 // pred_check
      _
    $region35: #{tpu_custom_call.1} parent=1 // pred_check_branch
      %278 = sbr.rel (0) target = $region37
    $region36: #{tpu_custom_call.1} parent=1 // pred_region
      %279 = dma.done [#allocation5], 16
    $region37: #{tpu_custom_call.1} parent=1 // pred_fallthru
      _
    %280 = sfence
    %281 = vsyncpa [#allocation4], 1
    %282 = vsyncpa [#allocation7], 1
    %283 = vsyncpa [#allocation5], 1

</llo_original>
